<compile_context>
chip_gen: v6e
topology: v6e:2x2x1
jax: 0.10.0
libtpu: 0.0.40
codegen_flags: <defaults>
</compile_context>

<pallas_src>
import functools

import jax
import jax.numpy as jnp
from jax.experimental import pallas as pl
from jax.experimental.pallas import tpu as pltpu

BN_EPS = 1e-5


def _round_up(v, m):
    return (v + m - 1) // m * m


def _resblock_kernel(xb_ref, xres_ref, w_ref, gb_ref, o_ref, *, n_valid):
    """One output-feature tile: out = x[:, tile] + relu(BN(x @ W[:, tile]))."""
    # Linear (bias dropped -- it cancels exactly in the batch-norm mean).
    # bf16 MXU inputs, f32 accumulation; all BN/ReLU math stays f32.
    y = jnp.dot(xb_ref[...], w_ref[...],
                preferred_element_type=jnp.float32)        # [N_pad, tile_f] f32

    # BatchNorm1d (training mode): batch mean / biased variance, one pass.
    inv_n = 1.0 / float(n_valid)
    if n_valid == xb_ref.shape[0]:
        ym = y                                             # no batch padding
    else:
        row = jax.lax.broadcasted_iota(jnp.int32, y.shape, 0)
        ym = jnp.where(row < n_valid, y, 0.0)              # mask pad rows from stats
    mean = jnp.sum(ym, axis=0, keepdims=True) * inv_n
    ex2 = jnp.sum(ym * ym, axis=0, keepdims=True) * inv_n
    var = jnp.maximum(ex2 - mean * mean, 0.0)              # guard cancellation

    gb = gb_ref[...]                                       # [2, tile_f] f32
    scale = gb[0:1, :] * jax.lax.rsqrt(var + BN_EPS)       # gamma * inv_std
    shift = gb[1:2, :] - mean * scale                      # beta - mean*scale
    y = y * scale + shift

    # ReLU + residual add (Linear is F -> F so this tile's columns match x's).
    o_ref[...] = xres_ref[...] + jnp.maximum(y, 0.0)


def prepare_resblock_params(w, gamma, beta, bias=None):
    """One-time parameter prep (call at init, not per forward).

    w: [F_in, F_out] already transposed for x @ W; gamma/beta: [F_out].
    The Linear bias is intentionally discarded: it is mathematically redundant
    before a training-mode BatchNorm.
    """
    del bias
    f_in, f_out = w.shape
    assert f_in == f_out, "ResBlock uses a square Linear(F, F)"
    f_pad = _round_up(f_out, 128)
    wp = jnp.pad(w, ((0, f_pad - f_in), (0, f_pad - f_out))).astype(jnp.bfloat16)
    gb = jnp.stack([gamma, beta], axis=0).astype(jnp.float32)        # [2, F]
    gb = jnp.pad(gb, ((0, 0), (0, f_pad - f_out)))                   # [2, F_pad]
    return wp, gb


@jax.jit
def resblock_forward(x, wp, gb):
    """x: [N, F] f32; wp, gb: outputs of prepare_resblock_params."""
    n, f = x.shape
    f_pad = wp.shape[1]
    assert wp.shape == (f_pad, f_pad) and gb.shape == (2, f_pad) and f_pad >= f
    n_pad = _round_up(n, 8)                    # sublane multiple

    # Feature tiling: prefer 256-wide (MXU-friendly on v6e/v7x) but keep at
    # least two grid steps so "parallel" can use both v7x TensorCores.
    if f_pad % 256 == 0 and f_pad // 256 >= 2:
        tile_f = 256
    else:
        tile_f = 128
    grid_f = f_pad // tile_f

    # Zero padding keeps real rows/columns exact: pad rows are masked out of
    # the BN statistics; pad feature columns come out as zero and are sliced off.
    xp = jnp.pad(x, ((0, n_pad - n), (0, f_pad - f)))
    xb = xp.astype(jnp.bfloat16)               # cast once per call, not per step

    kernel = functools.partial(_resblock_kernel, n_valid=n)

    flops = 2 * n_pad * f_pad * f_pad + 8 * n_pad * f_pad
    bytes_accessed = (n_pad * f_pad * 2        # resident bf16 x
                      + n_pad * f_pad * 4      # f32 x (residual)
                      + f_pad * f_pad * 2      # bf16 W
                      + 2 * f_pad * 4          # gamma/beta
                      + n_pad * f_pad * 4)     # output

    blk_bytes = (n_pad * f_pad * 2             # resident bf16 x, Buffered(1)
                 + 2 * n_pad * tile_f * 4      # f32 residual tile, double-buffered
                 + 2 * f_pad * tile_f * 2      # bf16 weight tile, double-buffered
                 + 2 * 8 * tile_f * 4          # gamma/beta tile (sublane-padded)
                 + 2 * n_pad * tile_f * 4      # output tile, double-buffered
                 + 2 * n_pad * tile_f * 4)     # f32 matmul/BN intermediates
    try:
        vmem_cap = int(pltpu.get_tpu_info().vmem_capacity_bytes)
    except Exception:                          # conservative default (v7x per-TC)
        vmem_cap = 64 << 20
    vmem_limit = int(max(32 << 20,
                         min(blk_bytes + (8 << 20), vmem_cap - (16 << 20))))

    out = pl.pallas_call(
        kernel,
        out_shape=jax.ShapeDtypeStruct((n_pad, f_pad), jnp.float32),
        grid_spec=pltpu.PrefetchScalarGridSpec(
            num_scalar_prefetch=0,
            grid=(grid_f,),
            in_specs=[
                # x (bf16, whole-resident MXU LHS); block index never changes
                # -> single buffer, no re-DMA across grid steps.
                pl.BlockSpec((n_pad, f_pad), lambda j: (0, 0),
                             pipeline_mode=pl.Buffered(1)),
                # x (f32) output-column tile for the residual add.
                pl.BlockSpec((n_pad, tile_f), lambda j: (0, j)),
                # W output-column tile (bf16).
                pl.BlockSpec((f_pad, tile_f), lambda j: (0, j)),
                # gamma (row 0) / beta (row 1) tile, packed.
                pl.BlockSpec((2, tile_f), lambda j: (0, j)),
            ],
            out_specs=pl.BlockSpec((n_pad, tile_f), lambda j: (0, j)),
        ),
        compiler_params=pltpu.CompilerParams(
            dimension_semantics=("parallel",),
            vmem_limit_bytes=vmem_limit,
        ),
        cost_estimate=pl.CostEstimate(
            flops=flops, transcendentals=f_pad, bytes_accessed=bytes_accessed),
    )(xb, xp, wp, gb)

    return out[:n, :f]


if __name__ == "__main__":
    # Module default: block = nn.Linear(256, 256), shape = 256.  Batch of 128
    # fills the MXU's 128 sublanes while staying small for this self-test.
    N, F = 128, 256

    key = jax.random.PRNGKey(0)
    kx, kw, kb = jax.random.split(key, 3)

    x = jax.random.normal(kx, (N, F), dtype=jnp.float32)

    # PyTorch nn.Linear default init: U(-1/sqrt(F), 1/sqrt(F)).
    bound = float(F) ** -0.5
    w_torch = jax.random.uniform(kw, (F, F), minval=-bound, maxval=bound,
                                 dtype=jnp.float32)          # [out, in] like nn.Linear
    b = jax.random.uniform(kb, (F,), minval=-bound, maxval=bound,
                           dtype=jnp.float32)
    w = w_torch.T                                            # [in, out] for x @ W

    # BatchNorm1d defaults: gamma = 1, beta = 0.
    gamma = jnp.ones((F,), dtype=jnp.float32)
    beta = jnp.zeros((F,), dtype=jnp.float32)

    # One-time parameter prep (bias intentionally dropped: cancels in BN mean).
    wp, gb = prepare_resblock_params(w, gamma, beta, bias=b)

    out = resblock_forward(x, wp, gb)
    out = jax.block_until_ready(out)

    # Pure-JAX f32 reference with the TRUE PyTorch semantics (f32 Linear WITH
    # bias, batch-stat BatchNorm, ReLU, residual).  Tolerance accounts for the
    # kernel's bf16 MXU inputs (f32 accumulate).
    y_ref = jnp.dot(x, w) + b[None, :]
    mu = jnp.mean(y_ref, axis=0, keepdims=True)
    var = jnp.mean((y_ref - mu) ** 2, axis=0, keepdims=True)
    y_ref = (y_ref - mu) * jax.lax.rsqrt(var + BN_EPS) * gamma[None, :] + beta[None, :]
    ref = x + jnp.maximum(y_ref, 0.0)

    err = float(jnp.max(jnp.abs(out - ref)))
    assert jnp.all(jnp.isfinite(out)), "non-finite output"
    assert jnp.allclose(out, ref, atol=3e-2, rtol=3e-2), f"max abs err = {err}"

    print("KERNEL_OK")
</pallas_src>

<mosaic_0001>
module attributes {stable_mosaic.version = 11 : i64} {
  func.func @_resblock_kernel(%arg0: i32, %arg1: memref<128x256xbf16, #tpu.memory_space<vmem>>, %arg2: memref<128x128xf32, #tpu.memory_space<vmem>>, %arg3: memref<256x128xbf16, #tpu.memory_space<vmem>>, %arg4: memref<2x128xf32, #tpu.memory_space<vmem>>, %arg5: memref<128x128xf32, #tpu.memory_space<vmem>>) attributes {dimension_semantics = [#tpu.dimension_semantics<parallel>], iteration_bounds = array<i64: 2>, scalar_prefetch = 0 : i64, scratch_operands = 0 : i64, tpu.core_type = #tpu.core_type<tc>, window_params = [{pipeline_mode = #tpu.pipeline_mode<synchronous>, transform_indices = @transform_0, window_bounds = array<i64: 128, 256>}, {transform_indices = @transform_1, window_bounds = array<i64: 128, 128>}, {transform_indices = @transform_2, window_bounds = array<i64: 256, 128>}, {transform_indices = @transform_3, window_bounds = array<i64: 2, 128>}, {transform_indices = @transform_4, window_bounds = array<i64: 128, 128>}]} {
    %c0 = arith.constant 0 : index
    %c0_0 = arith.constant 0 : index
    %0 = vector.load %arg1[%c0, %c0_0] : memref<128x256xbf16, #tpu.memory_space<vmem>>, vector<128x256xbf16>
    %c0_1 = arith.constant 0 : index
    %c0_2 = arith.constant 0 : index
    %1 = vector.load %arg3[%c0_1, %c0_2] : memref<256x128xbf16, #tpu.memory_space<vmem>>, vector<256x128xbf16>
    %cst = arith.constant dense<0.000000e+00> : vector<128x128xf32>
    %2 = tpu.matmul %0, %1, %cst {dimension_numbers = #tpu.dot_dimension_numbers<[1], [0], [0], [1], [0, 0, 1, 1], [], []>} : vector<128x256xbf16>, vector<256x128xbf16>, vector<128x128xf32> -> vector<128x128xf32>
    %cst_3 = arith.constant dense<0.000000e+00> : vector<128xf32>
    %3 = vector.multi_reduction <add>, %2, %cst_3 [0] : vector<128x128xf32> to vector<128xf32>
    %4 = vector.shape_cast %3 : vector<128xf32> to vector<1x128xf32>
    %cst_4 = arith.constant 7.812500e-03 : f32
    %5 = vector.broadcast %cst_4 : f32 to vector<1x128xf32>
    %6 = arith.mulf %4, %5 : vector<1x128xf32>
    %7 = arith.mulf %2, %2 : vector<128x128xf32>
    %cst_5 = arith.constant dense<0.000000e+00> : vector<128xf32>
    %8 = vector.multi_reduction <add>, %7, %cst_5 [0] : vector<128x128xf32> to vector<128xf32>
    %9 = vector.shape_cast %8 : vector<128xf32> to vector<1x128xf32>
    %cst_6 = arith.constant 7.812500e-03 : f32
    %10 = vector.broadcast %cst_6 : f32 to vector<1x128xf32>
    %11 = arith.mulf %9, %10 : vector<1x128xf32>
    %12 = arith.mulf %6, %6 : vector<1x128xf32>
    %13 = arith.subf %11, %12 : vector<1x128xf32>
    %cst_7 = arith.constant 0.000000e+00 : f32
    %14 = vector.broadcast %cst_7 : f32 to vector<1x128xf32>
    %15 = arith.maximumf %13, %14 : vector<1x128xf32>
    %c0_8 = arith.constant 0 : index
    %c0_9 = arith.constant 0 : index
    %16 = vector.load %arg4[%c0_8, %c0_9] : memref<2x128xf32, #tpu.memory_space<vmem>>, vector<2x128xf32>
    %17 = vector.extract_strided_slice %16 {offsets = [0, 0], sizes = [1, 128], strides = [1, 1]} : vector<2x128xf32> to vector<1x128xf32>
    %cst_10 = arith.constant 9.99999974E-6 : f32
    %18 = vector.broadcast %cst_10 : f32 to vector<1x128xf32>
    %19 = arith.addf %15, %18 : vector<1x128xf32>
    %20 = math.rsqrt %19 : vector<1x128xf32>
    %21 = arith.mulf %17, %20 : vector<1x128xf32>
    %22 = vector.extract_strided_slice %16 {offsets = [1, 0], sizes = [1, 128], strides = [1, 1]} : vector<2x128xf32> to vector<1x128xf32>
    %23 = arith.mulf %6, %21 : vector<1x128xf32>
    %24 = arith.subf %22, %23 : vector<1x128xf32>
    %25 = vector.broadcast %21 : vector<1x128xf32> to vector<128x128xf32>
    %26 = arith.mulf %2, %25 : vector<128x128xf32>
    %27 = vector.broadcast %24 : vector<1x128xf32> to vector<128x128xf32>
    %28 = arith.addf %26, %27 : vector<128x128xf32>
    %c0_11 = arith.constant 0 : index
    %c0_12 = arith.constant 0 : index
    %29 = vector.load %arg2[%c0_11, %c0_12] : memref<128x128xf32, #tpu.memory_space<vmem>>, vector<128x128xf32>
    %cst_13 = arith.constant 0.000000e+00 : f32
    %30 = vector.broadcast %cst_13 : f32 to vector<128x128xf32>
    %31 = arith.maximumf %28, %30 : vector<128x128xf32>
    %32 = arith.addf %29, %31 : vector<128x128xf32>
    %c0_14 = arith.constant 0 : index
    %c0_15 = arith.constant 0 : index
    %33 = vector.load %arg5[%c0_14, %c0_15] : memref<128x128xf32, #tpu.memory_space<vmem>>, vector<128x128xf32>
    tpu.vector_store %arg5[%c0_14, %c0_15], %32 {strides = array<i32>} : memref<128x128xf32, #tpu.memory_space<vmem>>, vector<128x128xf32>,
    return
  }
  func.func @transform_0(%arg0: i32) -> (i32, i32) {
    %c0_i32 = arith.constant 0 : i32
    %c0_i32_0 = arith.constant 0 : i32
    %c0_i32_1 = arith.constant 0 : i32
    return %c0_i32, %c0_i32_0 : i32, i32
  }
  func.func @transform_1(%arg0: i32) -> (i32, i32) {
    %c0_i32 = arith.constant 0 : i32
    %c0_i32_0 = arith.constant 0 : i32
    return %c0_i32, %arg0 : i32, i32
  }
  func.func @transform_2(%arg0: i32) -> (i32, i32) {
    %c0_i32 = arith.constant 0 : i32
    %c0_i32_0 = arith.constant 0 : i32
    return %c0_i32, %arg0 : i32, i32
  }
  func.func @transform_3(%arg0: i32) -> (i32, i32) {
    %c0_i32 = arith.constant 0 : i32
    %c0_i32_0 = arith.constant 0 : i32
    return %c0_i32, %arg0 : i32, i32
  }
  func.func @transform_4(%arg0: i32) -> (i32, i32) {
    %c0_i32 = arith.constant 0 : i32
    %c0_i32_0 = arith.constant 0 : i32
    return %c0_i32, %arg0 : i32, i32
  }
}

</mosaic_0001>

<llo_original>
// kernel: resblock_forward.1
$region0: #{resblock_forward.1}
  #allocation0 [shape = 'u32[]', space=smem, size = 0x4, offset = 0x4, fixed_abs, tag = 'smem constant byte address 0x4 - core index']
  #allocation1 [shape = 'u32[144,128]{1,0:T(1,128)}', space=vmem, size = 0x12000, scoped, tag = 'internal scratch']
  %s0 = inlined_call_operand.vmem [shape: bf16[128,256], index: 0, kind: input, shape index: {}]
  %s1 = inlined_call_operand.vmem [shape: f32[128,256], index: 1, kind: input, shape index: {}]
  %s2 = inlined_call_operand.hbm [shape: bf16[256,256], index: 2, kind: input, shape index: {}]
  %s3 = inlined_call_operand.vmem [shape: f32[2,256], index: 3, kind: input, shape index: {}]
  %s4 = inlined_call_operand.hbm [shape: f32[128,256], index: 4, kind: output, shape index: {}]
  %s5 = sld [smem:[#allocation0]]
  $region91: #{resblock_forward.1} parent=0
    _
  %s7 = ssub.s32 1, %s5
  %s8 = scalar_select 0, %s7, %s5
  $region1: #{resblock_forward.1} parent=0
    #allocation2 [shape = 'u8[131072]{0}', space=vmem, size = 0x20000, scoped, tag = 'input window, operand 1']
    #allocation3 [shape = 'u8[131072]{0}', space=vmem, size = 0x20000, scoped, tag = 'input window, operand 2']
    #allocation4 [shape = 's32[2]{0}', space=sflag, size = 0x8, scoped, tag = 'scoped memory for resblock_forward.1']
    #allocation5 [shape = 's32[2]{0}', space=sflag, size = 0x8, scoped, tag = 'scoped memory for resblock_forward.1']
    #allocation6 [shape = 'u8[131072]{0}', space=vmem, size = 0x20000, scoped, tag = 'output window, operand 0']
    %9 = vsyncpa [#allocation4], 0
    %s10 = scalar_lea.sflag [#allocation4], 1
    %11 = vsyncpa %s10, 0
    %12 = vsyncpa [#allocation5], 0
    %s13 = scalar_lea.sflag [#allocation5], 1
    %14 = vsyncpa %s13, 0
    loop: start=0, step=1, limit=4
    $region2: #{resblock_forward.1} parent=1 // loop_pre_header
      _
    $region3: #{resblock_forward.1} parent=1 // loop_header
      %s16 = sphi 0, %s20
      %p17 = scmp.ge.s32.totalorder %s16, 4
      %s24 = sphi 0, %s24
      %s26 = sphi 0, %s24
      %s27 = sphi 0, %s26
      %s41 = sphi 0, %s27
      %s47 = sphi 0, %s49
      %s50 = sphi 0, %s47
      %s51 = sphi 0, %s50
      %s67 = sphi 0, %s51
      %s73 = sphi 0, %s75
      %s76 = sphi 0, %s73
      %s77 = sphi 0, %s76
      %s93 = sphi 0, %s77
      %s99 = sphi 0, %s101
      %s102 = sphi 0, %s99
      %s103 = sphi 0, %s102
      %s119 = sphi 0, %s103
      %s125 = sphi 0, %s127
      %s128 = sphi 0, %s125
      %s129 = sphi 0, %s128
      %s145 = sphi 0, %s129
    $region4: #{resblock_forward.1} parent=1 // loop_header_branch
      %19 = sbr.rel (%p17) target = $region8
    $region5: #{resblock_forward.1} parent=1 // loop_body
      %s21 = ssub.s32 %s16, 1
      %s22 = ssub.s32 %s16, 2
      %s23 = sadd.s32 %s16, 1
      %s25 = sadd.s32 %s24, 1
      %p28 = scmp.eq.s32.totalorder %s16, 1
      %p29 = scmp.ne.s32.totalorder %s24, %s26
      %p30 = scmp.eq.s32.totalorder %s16, 0
      %p31 = por %p29, %p30
      %p32 = scmp.ne.s32.totalorder %s24, %s26
      %p33 = scmp.eq.s32.totalorder %s21, 1
      %p34 = por %p32, %p33
      %p35 = scmp.ne.s32.totalorder %s26, %s27
      %p36 = scmp.eq.s32.totalorder %s21, 0
      %p37 = por %p35, %p36
      %p38 = scmp.ne.s32.totalorder %s26, %s27
      %p39 = scmp.eq.s32.totalorder %s22, 1
      %p40 = por %p38, %p39
      %p42 = scmp.ne.s32.totalorder %s27, %s41
      %p43 = scmp.eq.s32.totalorder %s22, 0
      %p44 = por %p42, %p43
      %s45 = ssub.s32 %s16, %s23
      %p46 = scmp.eq.s32.totalorder %s45, 0
      %s48 = sadd.s32 %s47, 1
      %s49 = scalar_select %p46, %s47, %s48
      %p52 = pneg %p46
      %p53 = scmp.eq.s32.totalorder %s16, 1
      %p54 = por %p52, %p53
      %p55 = scmp.ne.s32.totalorder %s47, %s50
      %p56 = scmp.eq.s32.totalorder %s16, 0
      %p57 = por %p55, %p56
      %p58 = scmp.ne.s32.totalorder %s47, %s50
      %p59 = scmp.eq.s32.totalorder %s21, 1
      %p60 = por %p58, %p59
      %p61 = scmp.ne.s32.totalorder %s50, %s51
      %p62 = scmp.eq.s32.totalorder %s21, 0
      %p63 = por %p61, %p62
      %p64 = scmp.ne.s32.totalorder %s50, %s51
      %p65 = scmp.eq.s32.totalorder %s22, 1
      %p66 = por %p64, %p65
      %p68 = scmp.ne.s32.totalorder %s51, %s67
      %p69 = scmp.eq.s32.totalorder %s22, 0
      %p70 = por %p68, %p69
      %s71 = ssub.s32 %s16, %s23
      %p72 = scmp.eq.s32.totalorder %s71, 0
      %s74 = sadd.s32 %s73, 1
      %s75 = scalar_select %p72, %s73, %s74
      %p78 = pneg %p72
      %p79 = scmp.eq.s32.totalorder %s16, 1
      %p80 = por %p78, %p79
      %p81 = scmp.ne.s32.totalorder %s73, %s76
      %p82 = scmp.eq.s32.totalorder %s16, 0
      %p83 = por %p81, %p82
      %p84 = scmp.ne.s32.totalorder %s73, %s76
      %p85 = scmp.eq.s32.totalorder %s21, 1
      %p86 = por %p84, %p85
      %p87 = scmp.ne.s32.totalorder %s76, %s77
      %p88 = scmp.eq.s32.totalorder %s21, 0
      %p89 = por %p87, %p88
      %p90 = scmp.ne.s32.totalorder %s76, %s77
      %p91 = scmp.eq.s32.totalorder %s22, 1
      %p92 = por %p90, %p91
      %p94 = scmp.ne.s32.totalorder %s77, %s93
      %p95 = scmp.eq.s32.totalorder %s22, 0
      %p96 = por %p94, %p95
      %s97 = ssub.s32 %s16, %s23
      %p98 = scmp.eq.s32.totalorder %s97, 0
      %s100 = sadd.s32 %s99, 1
      %s101 = scalar_select %p98, %s99, %s100
      %p104 = pneg %p98
      %p105 = scmp.eq.s32.totalorder %s16, 1
      %p106 = por %p104, %p105
      %p107 = scmp.ne.s32.totalorder %s99, %s102
      %p108 = scmp.eq.s32.totalorder %s16, 0
      %p109 = por %p107, %p108
      %p110 = scmp.ne.s32.totalorder %s99, %s102
      %p111 = scmp.eq.s32.totalorder %s21, 1
      %p112 = por %p110, %p111
      %p113 = scmp.ne.s32.totalorder %s102, %s103
      %p114 = scmp.eq.s32.totalorder %s21, 0
      %p115 = por %p113, %p114
      %p116 = scmp.ne.s32.totalorder %s102, %s103
      %p117 = scmp.eq.s32.totalorder %s22, 1
      %p118 = por %p116, %p117
      %p120 = scmp.ne.s32.totalorder %s103, %s119
      %p121 = scmp.eq.s32.totalorder %s22, 0
      %p122 = por %p120, %p121
      %s123 = ssub.s32 %s16, %s23
      %p124 = scmp.eq.s32.totalorder %s123, 0
      %s126 = sadd.s32 %s125, 1
      %s127 = scalar_select %p124, %s125, %s126
      %p130 = pneg %p124
      %p131 = scmp.eq.s32.totalorder %s16, 1
      %p132 = por %p130, %p131
      %p133 = scmp.ne.s32.totalorder %s125, %s128
      %p134 = scmp.eq.s32.totalorder %s16, 0
      %p135 = por %p133, %p134
      %p136 = scmp.ne.s32.totalorder %s125, %s128
      %p137 = scmp.eq.s32.totalorder %s21, 1
      %p138 = por %p136, %p137
      %p139 = scmp.ne.s32.totalorder %s128, %s129
      %p140 = scmp.eq.s32.totalorder %s21, 0
      %p141 = por %p139, %p140
      %p142 = scmp.ne.s32.totalorder %s128, %s129
      %p143 = scmp.eq.s32.totalorder %s22, 1
      %p144 = por %p142, %p143
      %p146 = scmp.ne.s32.totalorder %s129, %s145
      %p147 = scmp.eq.s32.totalorder %s22, 0
      %p148 = por %p146, %p147
      %p149 = scmp.le.s32.totalorder 1, %s16
      %p150 = scmp.lt.s32.totalorder %s16, 3
      %p151 = pnand %p149, %p150
      %p152 = pneg %p151
      // Predicated region
      $region9: #{resblock_forward.1} parent=5 // pred_check
        _
      $region10: #{resblock_forward.1} parent=5 // pred_check_branch
        %154 = sbr.rel (%p151) target = $region12
      $region11: #{resblock_forward.1} parent=5 // pred_region
        %s155 = ssub.s32 %s16, 1
        // Predicated region
        $region13: #{resblock_forward.1} parent=11 // pred_check
          %p156 = pneg %p37
        $region14: #{resblock_forward.1} parent=11 // pred_check_branch
          %158 = sbr.rel (%p156) target = $region16
        $region15: #{resblock_forward.1} parent=11 // pred_region
          _
        $region16: #{resblock_forward.1} parent=11 // pred_fallthru
          _
      $region12: #{resblock_forward.1} parent=5 // pred_fallthru
        _
      %p159 = scmp.lt.s32.totalorder %s16, 2
      // Predicated region
      $region17: #{resblock_forward.1} parent=5 // pred_check
        %p160 = pneg %p159
      $region18: #{resblock_forward.1} parent=5 // pred_check_branch
        %162 = sbr.rel (%p160) target = $region20
      $region19: #{resblock_forward.1} parent=5 // pred_region
        // Predicated region
        $region21: #{resblock_forward.1} parent=19 // pred_check
          %p163 = pneg %p57
        $region22: #{resblock_forward.1} parent=19 // pred_check_branch
          %165 = sbr.rel (%p163) target = $region24
        $region23: #{resblock_forward.1} parent=19 // pred_region
          %s166 = sand.u32 %s47, 1
          %s167 = sand.u32 %s47, 1
          %s168 = smul.addr %s167, 128
          %s169 = scalar_lea.vmem [#allocation2], %s168
          %s170 = smul.addr %s16, 8
          %s171 = scalar_lea.vmem %s1, %s170
          // Predicated region
          $region25: #{resblock_forward.1} parent=23 // pred_check
            _
          $region26: #{resblock_forward.1} parent=23 // pred_check_branch
            %173 = sbr.rel (0) target = $region28
          $region27: #{resblock_forward.1} parent=23 // pred_region
            // Predicated region
            $region29: #{resblock_forward.1} parent=27 // pred_check
              _
            $region30: #{resblock_forward.1} parent=27 // pred_check_branch
              %175 = sbr.rel (0) target = $region32
            $region31: #{resblock_forward.1} parent=27 // pred_region
              // Predicated region
              $region44: #{resblock_forward.1} parent=31 // pred_check
                _
              $region45: #{resblock_forward.1} parent=31 // pred_check_branch
                %221 = sbr.rel (0) target = $region47
              $region46: #{resblock_forward.1} parent=31 // pred_region
                loop: start=0, step=1, limit=1
                $region48: #{resblock_forward.1} parent=46 // loop_pre_header
                  _
                $region49: #{resblock_forward.1} parent=46 // loop_header
                  %s223 = sphi 0, %s227
                  %p224 = scmp.ge.s32.totalorder %s223, 1
                  %s228 = sphi %s171, %s171
                  %s229 = sphi %s169, %s169
                $region50: #{resblock_forward.1} parent=46 // loop_header_branch
                  %226 = sbr.rel (%p224) target = $region54
                $region51: #{resblock_forward.1} parent=46 // loop_body
                  %v230 = vld [vmem:[%s228] sm:$0xff]
                  %231 = vst [vmem:[%s229] sm:$0xff] %v230
                  %v232 = vld [vmem:[%s228 + $0x10] sm:$0xff]
                  %233 = vst [vmem:[%s229 + $0x8] sm:$0xff] %v232
                  %v234 = vld [vmem:[%s228 + $0x20] sm:$0xff]
                  %235 = vst [vmem:[%s229 + $0x10] sm:$0xff] %v234
                  %v236 = vld [vmem:[%s228 + $0x30] sm:$0xff]
                  %237 = vst [vmem:[%s229 + $0x18] sm:$0xff] %v236
                  %v238 = vld [vmem:[%s228 + $0x40] sm:$0xff]
                  %239 = vst [vmem:[%s229 + $0x20] sm:$0xff] %v238
                  %v240 = vld [vmem:[%s228 + $0x50] sm:$0xff]
                  %241 = vst [vmem:[%s229 + $0x28] sm:$0xff] %v240
                  %v242 = vld [vmem:[%s228 + $0x60] sm:$0xff]
                  %243 = vst [vmem:[%s229 + $0x30] sm:$0xff] %v242
                  %v244 = vld [vmem:[%s228 + $0x70] sm:$0xff]
                  %245 = vst [vmem:[%s229 + $0x38] sm:$0xff] %v244
                  %v246 = vld [vmem:[%s228 + $0x80] sm:$0xff]
                  %247 = vst [vmem:[%s229 + $0x40] sm:$0xff] %v246
                  %v248 = vld [vmem:[%s228 + $0x90] sm:$0xff]
                  %249 = vst [vmem:[%s229 + $0x48] sm:$0xff] %v248
                  %v250 = vld [vmem:[%s228 + $0xa0] sm:$0xff]
                  %251 = vst [vmem:[%s229 + $0x50] sm:$0xff] %v250
                  %v252 = vld [vmem:[%s228 + $0xb0] sm:$0xff]
                  %253 = vst [vmem:[%s229 + $0x58] sm:$0xff] %v252
                  %v254 = vld [vmem:[%s228 + $0xc0] sm:$0xff]
                  %255 = vst [vmem:[%s229 + $0x60] sm:$0xff] %v254
                  %v256 = vld [vmem:[%s228 + $0xd0] sm:$0xff]
                  %257 = vst [vmem:[%s229 + $0x68] sm:$0xff] %v256
                  %v258 = vld [vmem:[%s228 + $0xe0] sm:$0xff]
                  %259 = vst [vmem:[%s229 + $0x70] sm:$0xff] %v258
                  %v260 = vld [vmem:[%s228 + $0xf0] sm:$0xff]
                  %261 = vst [vmem:[%s229 + $0x78] sm:$0xff] %v260
                $region52: #{resblock_forward.1} parent=46 // loop_footer
                  %s227 = sadd.s32 1, %s223
                $region53: #{resblock_forward.1} parent=46 // loop_footer_branch
                  %222 = sbr.rel target = $region49
                $region54: #{resblock_forward.1} parent=46 // loop_exit
                  _
              $region47: #{resblock_forward.1} parent=31 // pred_fallthru
                _
              // Predicated region
              $region55: #{resblock_forward.1} parent=31 // pred_check
                _
              $region56: #{resblock_forward.1} parent=31 // pred_check_branch
                %263 = sbr.rel target = $region58
              $region57: #{resblock_forward.1} parent=31 // pred_region
                _
              $region58: #{resblock_forward.1} parent=31 // pred_fallthru
                _
            $region32: #{resblock_forward.1} parent=27 // pred_fallthru
              _
            // Predicated region
            $region33: #{resblock_forward.1} parent=27 // pred_check
              _
            $region34: #{resblock_forward.1} parent=27 // pred_check_branch
              %177 = sbr.rel target = $region36
            $region35: #{resblock_forward.1} parent=27 // pred_region
              %s179 = ssub.s32 256, 1
              loop: start=0, step=1, limit=1
              $region37: #{resblock_forward.1} parent=35 // loop_pre_header
                _
              $region38: #{resblock_forward.1} parent=35 // loop_header
                %s181 = sphi 0, %s185
                %p182 = scmp.ge.s32.totalorder %s181, 1
                %s186 = sphi %s171, %s171
                %s187 = sphi %s169, %s169
              $region39: #{resblock_forward.1} parent=35 // loop_header_branch
                %184 = sbr.rel (%p182) target = $region43
              $region40: #{resblock_forward.1} parent=35 // loop_body
                %v188 = vld [vmem:[%s186] sm:%s179]
                %189 = vst [vmem:[%s187] sm:%s179] %v188
                %v190 = vld [vmem:[%s186 + $0x10] sm:%s179]
                %191 = vst [vmem:[%s187 + $0x8] sm:%s179] %v190
                %v192 = vld [vmem:[%s186 + $0x20] sm:%s179]
                %193 = vst [vmem:[%s187 + $0x10] sm:%s179] %v192
                %v194 = vld [vmem:[%s186 + $0x30] sm:%s179]
                %195 = vst [vmem:[%s187 + $0x18] sm:%s179] %v194
                %v196 = vld [vmem:[%s186 + $0x40] sm:%s179]
                %197 = vst [vmem:[%s187 + $0x20] sm:%s179] %v196
                %v198 = vld [vmem:[%s186 + $0x50] sm:%s179]
                %199 = vst [vmem:[%s187 + $0x28] sm:%s179] %v198
                %v200 = vld [vmem:[%s186 + $0x60] sm:%s179]
                %201 = vst [vmem:[%s187 + $0x30] sm:%s179] %v200
                %v202 = vld [vmem:[%s186 + $0x70] sm:%s179]
                %203 = vst [vmem:[%s187 + $0x38] sm:%s179] %v202
                %v204 = vld [vmem:[%s186 + $0x80] sm:%s179]
                %205 = vst [vmem:[%s187 + $0x40] sm:%s179] %v204
                %v206 = vld [vmem:[%s186 + $0x90] sm:%s179]
                %207 = vst [vmem:[%s187 + $0x48] sm:%s179] %v206
                %v208 = vld [vmem:[%s186 + $0xa0] sm:%s179]
                %209 = vst [vmem:[%s187 + $0x50] sm:%s179] %v208
                %v210 = vld [vmem:[%s186 + $0xb0] sm:%s179]
                %211 = vst [vmem:[%s187 + $0x58] sm:%s179] %v210
                %v212 = vld [vmem:[%s186 + $0xc0] sm:%s179]
                %213 = vst [vmem:[%s187 + $0x60] sm:%s179] %v212
                %v214 = vld [vmem:[%s186 + $0xd0] sm:%s179]
                %215 = vst [vmem:[%s187 + $0x68] sm:%s179] %v214
                %v216 = vld [vmem:[%s186 + $0xe0] sm:%s179]
                %217 = vst [vmem:[%s187 + $0x70] sm:%s179] %v216
                %v218 = vld [vmem:[%s186 + $0xf0] sm:%s179]
                %219 = vst [vmem:[%s187 + $0x78] sm:%s179] %v218
              $region41: #{resblock_forward.1} parent=35 // loop_footer
                %s185 = sadd.s32 1, %s181
              $region42: #{resblock_forward.1} parent=35 // loop_footer_branch
                %180 = sbr.rel target = $region38
              $region43: #{resblock_forward.1} parent=35 // loop_exit
                _
            $region36: #{resblock_forward.1} parent=27 // pred_fallthru
              _
          $region28: #{resblock_forward.1} parent=23 // pred_fallthru
            _
          %264 = vnop
        $region24: #{resblock_forward.1} parent=19 // pred_fallthru
          _
        // Predicated region
        $region59: #{resblock_forward.1} parent=19 // pred_check
          %p265 = pneg %p83
        $region60: #{resblock_forward.1} parent=19 // pred_check_branch
          %267 = sbr.rel (%p265) target = $region62
        $region61: #{resblock_forward.1} parent=19 // pred_region
          %s268 = sand.u32 %s73, 1
          %s269 = scalar_lea.sflag [#allocation4], %s268
          %s270 = sand.u32 %s73, 1
          %s271 = smul.addr %s270, 128
          %s272 = scalar_lea.vmem [#allocation3], %s271
          %s274 = ssub.s32 2048, 2048
          %275 = vsyncadd %s269, %s274
          %s276 = smul.addr %s16, 64
          %s277 = scalar_lea.hbm %s2, %s276
          %s278 = sshll.u32 %s272, 4
          %s279 = int_to_ptr.vmem [resolvable:$true] %s278
          %284 = dma.hbm_to_vmem [thread:$0]  %s277, 2048, %s279, %s269, 128, 64, 4
        $region62: #{resblock_forward.1} parent=19 // pred_fallthru
          _
        // Predicated region
        $region63: #{resblock_forward.1} parent=19 // pred_check
          %p285 = pneg %p109
        $region64: #{resblock_forward.1} parent=19 // pred_check_branch
          %287 = sbr.rel (%p285) target = $region66
        $region65: #{resblock_forward.1} parent=19 // pred_region
          %p288 = scmp.lt.s32.totalorder %s16, 1
          %s289 = scalar_select %p288, %s16, 1
          %s290 = smul.addr %s289, 2
          %s291 = scalar_lea.vmem %s3, %s290
        $region66: #{resblock_forward.1} parent=19 // pred_fallthru
          _
      $region20: #{resblock_forward.1} parent=5 // pred_fallthru
        _
      %p292 = scmp.le.s32.totalorder 1, %s16
      %p293 = scmp.lt.s32.totalorder %s16, 3
      %p294 = pnand %p292, %p293
      %p295 = pneg %p294
      // Predicated region
      $region67: #{resblock_forward.1} parent=5 // pred_check
        _
      $region68: #{resblock_forward.1} parent=5 // pred_check_branch
        %297 = sbr.rel (%p294) target = $region70
      $region69: #{resblock_forward.1} parent=5 // pred_region
        %s298 = ssub.s32 %s16, 1
        %s299 = sand.u32 %s50, 1
        %s300 = sand.u32 %s50, 1
        %s301 = smul.addr %s300, 128
        %s302 = scalar_lea.vmem [#allocation2], %s301
        // Predicated region
        $region71: #{resblock_forward.1} parent=69 // pred_check
          %p303 = pneg %p63
        $region72: #{resblock_forward.1} parent=69 // pred_check_branch
          %305 = sbr.rel (%p303) target = $region74
        $region73: #{resblock_forward.1} parent=69 // pred_region
          _
        $region74: #{resblock_forward.1} parent=69 // pred_fallthru
          _
        %s306 = sand.u32 %s76, 1
        %s307 = scalar_lea.sflag [#allocation4], %s306
        %s308 = sand.u32 %s76, 1
        %s309 = smul.addr %s308, 128
        %s310 = scalar_lea.vmem [#allocation3], %s309
        // Predicated region
        $region75: #{resblock_forward.1} parent=69 // pred_check
          %p311 = pneg %p89
        $region76: #{resblock_forward.1} parent=69 // pred_check_branch
          %313 = sbr.rel (%p311) target = $region78
        $region77: #{resblock_forward.1} parent=69 // pred_region
          %314 = dma.done %s307, 2048
        $region78: #{resblock_forward.1} parent=69 // pred_fallthru
          _
        %p315 = pneg %p37
        %p316 = pneg %p34
        %s317 = sand.u32 %s50, 1
        %s318 = sand.u32 %s50, 1
        %s319 = smul.addr %s318, 128
        %s320 = scalar_lea.vmem [#allocation2], %s319
        %p321 = pneg %p63
        %p322 = pneg %p60
        %s323 = sand.u32 %s76, 1
        %s324 = scalar_lea.sflag [#allocation4], %s323
        %s325 = sand.u32 %s76, 1
        %s326 = smul.addr %s325, 128
        %s327 = scalar_lea.vmem [#allocation3], %s326
        %p328 = pneg %p89
        %p329 = pneg %p86
        %p330 = scmp.lt.s32.totalorder %s21, 1
        %s331 = scalar_select %p330, %s21, 1
        %s332 = smul.addr %s331, 2
        %s333 = scalar_lea.vmem %s3, %s332
        %p334 = pneg %p115
        %p335 = pneg %p112
        %p336 = pneg %p141
        %p337 = pneg %p138
        %s338 = sand.u32 %s128, 1
        %s339 = scalar_lea.sflag [#allocation5], %s338
        %s340 = sand.u32 %s128, 1
        %s341 = smul.addr %s340, 128
        %s342 = scalar_lea.vmem [#allocation6], %s341
        %p343 = scmp.lt.s32.totalorder %s21, 1
        %s344 = scalar_select %p343, %s21, 1
        %s345 = smul.addr %s344, 2
        %s346 = scalar_lea.vmem %s3, %s345
        %v348 = vld [vmem:[%s0] sm:$0xff]
        %v349 = vld [vmem:[%s0 + $0x8] sm:$0xff]
        %v350 = vld [vmem:[%s0 + $0x10] sm:$0xff]
        %v351 = vld [vmem:[%s0 + $0x18] sm:$0xff]
        %v352 = vld [vmem:[%s0 + $0x20] sm:$0xff]
        %v353 = vld [vmem:[%s0 + $0x28] sm:$0xff]
        %v354 = vld [vmem:[%s0 + $0x30] sm:$0xff]
        %v355 = vld [vmem:[%s0 + $0x38] sm:$0xff]
        %v356 = vld [vmem:[%s0 + $0x40] sm:$0xff]
        %v357 = vld [vmem:[%s0 + $0x48] sm:$0xff]
        %v358 = vld [vmem:[%s0 + $0x50] sm:$0xff]
        %v359 = vld [vmem:[%s0 + $0x58] sm:$0xff]
        %v360 = vld [vmem:[%s0 + $0x60] sm:$0xff]
        %v361 = vld [vmem:[%s0 + $0x68] sm:$0xff]
        %v362 = vld [vmem:[%s0 + $0x70] sm:$0xff]
        %v363 = vld [vmem:[%s0 + $0x78] sm:$0xff]
        %v364 = vld [vmem:[%s310] sm:$0xf]
        %v365 = vld [vmem:[%s310 + $0x4] sm:$0xf]
        %v366 = vld [vmem:[%s310 + $0x8] sm:$0xf]
        %v367 = vld [vmem:[%s310 + $0xc] sm:$0xf]
        %v368 = vld [vmem:[%s310 + $0x10] sm:$0xf]
        %v369 = vld [vmem:[%s310 + $0x14] sm:$0xf]
        %v370 = vld [vmem:[%s310 + $0x18] sm:$0xf]
        %v371 = vld [vmem:[%s310 + $0x1c] sm:$0xf]
        %v372 = vld [vmem:[%s310 + $0x20] sm:$0xf]
        %v373 = vld [vmem:[%s310 + $0x24] sm:$0xf]
        %v374 = vld [vmem:[%s310 + $0x28] sm:$0xf]
        %v375 = vld [vmem:[%s310 + $0x2c] sm:$0xf]
        %v376 = vld [vmem:[%s310 + $0x30] sm:$0xf]
        %v377 = vld [vmem:[%s310 + $0x34] sm:$0xf]
        %v378 = vld [vmem:[%s310 + $0x38] sm:$0xf]
        %v379 = vld [vmem:[%s310 + $0x3c] sm:$0xf]
        %v380 = vld [vmem:[%s310 + $0x40] sm:$0xf]
        %v381 = vld [vmem:[%s310 + $0x44] sm:$0xf]
        %v382 = vld [vmem:[%s310 + $0x48] sm:$0xf]
        %v383 = vld [vmem:[%s310 + $0x4c] sm:$0xf]
        %v384 = vld [vmem:[%s310 + $0x50] sm:$0xf]
        %v385 = vld [vmem:[%s310 + $0x54] sm:$0xf]
        %v386 = vld [vmem:[%s310 + $0x58] sm:$0xf]
        %v387 = vld [vmem:[%s310 + $0x5c] sm:$0xf]
        %v388 = vld [vmem:[%s310 + $0x60] sm:$0xf]
        %v389 = vld [vmem:[%s310 + $0x64] sm:$0xf]
        %v390 = vld [vmem:[%s310 + $0x68] sm:$0xf]
        %v391 = vld [vmem:[%s310 + $0x6c] sm:$0xf]
        %v392 = vld [vmem:[%s310 + $0x70] sm:$0xf]
        %v393 = vld [vmem:[%s310 + $0x74] sm:$0xf]
        %v394 = vld [vmem:[%s310 + $0x78] sm:$0xf]
        %v395 = vld [vmem:[%s310 + $0x7c] sm:$0xf]
        %v412 = vunpack.c.l.b16 %v348
        %v413 = vunpack.c.h.b16 %v348
        %v414 = vunpack.c.l.b16 %v349
        %v415 = vunpack.c.h.b16 %v349
        %v416 = vunpack.c.l.b16 %v350
        %v417 = vunpack.c.h.b16 %v350
        %v418 = vunpack.c.l.b16 %v351
        %v419 = vunpack.c.h.b16 %v351
        %v420 = vunpack.c.l.b16 %v352
        %v421 = vunpack.c.h.b16 %v352
        %v422 = vunpack.c.l.b16 %v353
        %v423 = vunpack.c.h.b16 %v353
        %v424 = vunpack.c.l.b16 %v354
        %v425 = vunpack.c.h.b16 %v354
        %v426 = vunpack.c.l.b16 %v355
        %v427 = vunpack.c.h.b16 %v355
        %v428 = vunpack.c.l.b16 %v356
        %v429 = vunpack.c.h.b16 %v356
        %v430 = vunpack.c.l.b16 %v357
        %v431 = vunpack.c.h.b16 %v357
        %v432 = vunpack.c.l.b16 %v358
        %v433 = vunpack.c.h.b16 %v358
        %v434 = vunpack.c.l.b16 %v359
        %v435 = vunpack.c.h.b16 %v359
        %v436 = vunpack.c.l.b16 %v360
        %v437 = vunpack.c.h.b16 %v360
        %v438 = vunpack.c.l.b16 %v361
        %v439 = vunpack.c.h.b16 %v361
        %v440 = vunpack.c.l.b16 %v362
        %v441 = vunpack.c.h.b16 %v362
        %v442 = vunpack.c.l.b16 %v363
        %v443 = vunpack.c.h.b16 %v363
        %v444 = vpack.c.b16 %v414, %v412
        %v445 = vpack.c.b16 %v415, %v413
        %v446 = vpack.c.b16 %v418, %v416
        %v447 = vpack.c.b16 %v419, %v417
        %v448 = vpack.c.b16 %v422, %v420
        %v449 = vpack.c.b16 %v423, %v421
        %v450 = vpack.c.b16 %v426, %v424
        %v451 = vpack.c.b16 %v427, %v425
        %v452 = vpack.c.b16 %v430, %v428
        %v453 = vpack.c.b16 %v431, %v429
        %v454 = vpack.c.b16 %v434, %v432
        %v455 = vpack.c.b16 %v435, %v433
        %v456 = vpack.c.b16 %v438, %v436
        %v457 = vpack.c.b16 %v439, %v437
        %v458 = vpack.c.b16 %v442, %v440
        %v459 = vpack.c.b16 %v443, %v441
        %v508 = vunpack.c.l.b16 %v364
        %v509 = vunpack.c.l.b16 %v365
        %v510 = vunpack.c.l.b16 %v366
        %v511 = vunpack.c.l.b16 %v367
        %v512 = vunpack.c.l.b16 %v368
        %v513 = vunpack.c.l.b16 %v369
        %v514 = vunpack.c.l.b16 %v370
        %v515 = vunpack.c.l.b16 %v371
        %v516 = vunpack.c.l.b16 %v372
        %v517 = vunpack.c.l.b16 %v373
        %v518 = vunpack.c.l.b16 %v374
        %v519 = vunpack.c.l.b16 %v375
        %v520 = vunpack.c.l.b16 %v376
        %v521 = vunpack.c.l.b16 %v377
        %v522 = vunpack.c.l.b16 %v378
        %v523 = vunpack.c.l.b16 %v379
        %v524 = vunpack.c.l.b16 %v380
        %v525 = vunpack.c.l.b16 %v381
        %v526 = vunpack.c.l.b16 %v382
        %v527 = vunpack.c.l.b16 %v383
        %v528 = vunpack.c.l.b16 %v384
        %v529 = vunpack.c.l.b16 %v385
        %v530 = vunpack.c.l.b16 %v386
        %v531 = vunpack.c.l.b16 %v387
        %v532 = vunpack.c.l.b16 %v388
        %v533 = vunpack.c.l.b16 %v389
        %v534 = vunpack.c.l.b16 %v390
        %v535 = vunpack.c.l.b16 %v391
        %v536 = vunpack.c.l.b16 %v392
        %v537 = vunpack.c.l.b16 %v393
        %v538 = vunpack.c.l.b16 %v394
        %v539 = vunpack.c.l.b16 %v395
        %v540 = vpack.c.b16 %v509, %v508
        %v541 = vpack.c.b16 %v511, %v510
        %v542 = vpack.c.b16 %v513, %v512
        %v543 = vpack.c.b16 %v515, %v514
        %v544 = vpack.c.b16 %v517, %v516
        %v545 = vpack.c.b16 %v519, %v518
        %v546 = vpack.c.b16 %v521, %v520
        %v547 = vpack.c.b16 %v523, %v522
        %v548 = vpack.c.b16 %v525, %v524
        %v549 = vpack.c.b16 %v527, %v526
        %v550 = vpack.c.b16 %v529, %v528
        %v551 = vpack.c.b16 %v531, %v530
        %v552 = vpack.c.b16 %v533, %v532
        %v553 = vpack.c.b16 %v535, %v534
        %v554 = vpack.c.b16 %v537, %v536
        %v555 = vpack.c.b16 %v539, %v538
        %572 = vmatprep.subr.bf16.mxu0 0
        %573 = vmatpush1.bf16.msra.mxu0 %v547
        %574 = vmatprep.subr.bf16.mxu0 0
        %575 = vmatpush1.bf16.msra.mxu0 %v546
        %576 = vmatprep.subr.bf16.mxu0 0
        %577 = vmatpush1.bf16.msra.mxu0 %v545
        %578 = vmatprep.subr.bf16.mxu0 0
        %579 = vmatpush1.bf16.msra.mxu0 %v544
        %580 = vmatprep.subr.bf16.mxu0 0
        %581 = vmatpush1.bf16.msra.mxu0 %v543
        %582 = vmatprep.subr.bf16.mxu0 0
        %583 = vmatpush1.bf16.msra.mxu0 %v542
        %584 = vmatprep.subr.bf16.mxu0 0
        %585 = vmatpush1.bf16.msra.mxu0 %v541
        %586 = vmatprep.subr.bf16.mxu0 0
        %587 = vmatpush1.bf16.msra.mxu0 %v540
        %588 = vmatprep.subr.bf16.mxu0 0
        %589 = vmatpush2.bf16.msra.mxu0 %v555
        %590 = vmatprep.subr.bf16.mxu0 0
        %591 = vmatpush2.bf16.msra.mxu0 %v554
        %592 = vmatprep.subr.bf16.mxu0 0
        %593 = vmatpush2.bf16.msra.mxu0 %v553
        %594 = vmatprep.subr.bf16.mxu0 0
        %595 = vmatpush2.bf16.msra.mxu0 %v552
        %596 = vmatprep.subr.bf16.mxu0 0
        %597 = vmatpush2.bf16.msra.mxu0 %v551
        %598 = vmatprep.subr.bf16.mxu0 0
        %599 = vmatpush2.bf16.msra.mxu0 %v550
        %600 = vmatprep.subr.bf16.mxu0 0
        %601 = vmatpush2.bf16.msra.mxu0 %v549
        %602 = vmatprep.subr.bf16.mxu0 0
        %603 = vmatpush2.bf16.msra.mxu0 %v548
        %604 = vmatprep.mubr.bf16.mxu0 %v445
        %605 = vmatmul.mubr.bf16.gmra.mxu0 %v444
        %v606 = vpop.f32.mrf.mxu0
        %v607 = vadd.f32 0.0, %v606
        %v608 = vpop.f32.mrf.mxu0
        %v609 = vpop.f32.mrf.mxu0
        %v610 = vadd.f32 0.0, %v609
        %v611 = vpop.f32.mrf.mxu0
        %612 = vmatprep.mubr.bf16.mxu0 %v447
        %613 = vmatmul.mubr.bf16.gmra.mxu0 %v446
        %v614 = vpop.f32.mrf.mxu0
        %v615 = vadd.f32 0.0, %v614
        %v616 = vpop.f32.mrf.mxu0
        %v617 = vpop.f32.mrf.mxu0
        %v618 = vadd.f32 0.0, %v617
        %v619 = vpop.f32.mrf.mxu0
        %620 = vmatprep.mubr.bf16.mxu0 %v449
        %621 = vmatmul.mubr.bf16.gmra.mxu0 %v448
        %v622 = vpop.f32.mrf.mxu0
        %v623 = vadd.f32 0.0, %v622
        %v624 = vpop.f32.mrf.mxu0
        %v625 = vpop.f32.mrf.mxu0
        %v626 = vadd.f32 0.0, %v625
        %v627 = vpop.f32.mrf.mxu0
        %628 = vmatprep.mubr.bf16.mxu0 %v451
        %629 = vmatmul.mubr.bf16.gmra.mxu0 %v450
        %v630 = vpop.f32.mrf.mxu0
        %v631 = vadd.f32 0.0, %v630
        %v632 = vpop.f32.mrf.mxu0
        %v633 = vpop.f32.mrf.mxu0
        %v634 = vadd.f32 0.0, %v633
        %v635 = vpop.f32.mrf.mxu0
        %636 = vmatprep.mubr.bf16.mxu0 %v453
        %637 = vmatmul.mubr.bf16.gmra.mxu0 %v452
        %v638 = vpop.f32.mrf.mxu0
        %v639 = vadd.f32 0.0, %v638
        %v640 = vpop.f32.mrf.mxu0
        %v641 = vpop.f32.mrf.mxu0
        %v642 = vadd.f32 0.0, %v641
        %v643 = vpop.f32.mrf.mxu0
        %644 = vmatprep.mubr.bf16.mxu0 %v455
        %645 = vmatmul.mubr.bf16.gmra.mxu0 %v454
        %v646 = vpop.f32.mrf.mxu0
        %v647 = vadd.f32 0.0, %v646
        %v648 = vpop.f32.mrf.mxu0
        %v649 = vpop.f32.mrf.mxu0
        %v650 = vadd.f32 0.0, %v649
        %v651 = vpop.f32.mrf.mxu0
        %652 = vmatprep.mubr.bf16.mxu0 %v457
        %653 = vmatmul.mubr.bf16.gmra.mxu0 %v456
        %v654 = vpop.f32.mrf.mxu0
        %v655 = vadd.f32 0.0, %v654
        %v656 = vpop.f32.mrf.mxu0
        %v657 = vpop.f32.mrf.mxu0
        %v658 = vadd.f32 0.0, %v657
        %v659 = vpop.f32.mrf.mxu0
        %660 = vmatprep.mubr.bf16.mxu0 %v459
        %661 = vmatmul.mubr.bf16.gmra.mxu0 %v458
        %v662 = vpop.f32.mrf.mxu0
        %v663 = vadd.f32 0.0, %v662
        %v664 = vpop.f32.mrf.mxu0
        %v665 = vpop.f32.mrf.mxu0
        %v666 = vadd.f32 0.0, %v665
        %v667 = vpop.f32.mrf.mxu0
        %668 = vdwg.mxu0
        %v669 = vadd.f32 %v607, %v610
        %v670 = vadd.f32 %v669, %v615
        %v671 = vadd.f32 %v670, %v618
        %v672 = vadd.f32 %v671, %v623
        %v673 = vadd.f32 %v672, %v626
        %v674 = vadd.f32 %v673, %v631
        %v675 = vadd.f32 %v674, %v634
        %v676 = vadd.f32 %v675, %v639
        %v677 = vadd.f32 %v676, %v642
        %v678 = vadd.f32 %v677, %v647
        %v679 = vadd.f32 %v678, %v650
        %v680 = vadd.f32 %v679, %v655
        %v681 = vadd.f32 %v680, %v658
        %v682 = vadd.f32 %v681, %v663
        %v683 = vadd.f32 %v682, %v666
        %v684 = vrot.slane %v683, 4
        %v685 = vadd.f32 %v683, %v684
        %v686 = vrot.slane %v685, 2
        %v687 = vadd.f32 %v685, %v686
        %v688 = vrot.slane %v687, 1
        %v689 = vadd.f32 %v687, %v688
        %v690 = vmul.f32 %v689, 0.0078125
        %v691 = vmul.f32 %v607, %v607
        %v692 = vmul.f32 %v610, %v610
        %v693 = vmul.f32 %v615, %v615
        %v694 = vmul.f32 %v618, %v618
        %v695 = vmul.f32 %v623, %v623
        %v696 = vmul.f32 %v626, %v626
        %v697 = vmul.f32 %v631, %v631
        %v698 = vmul.f32 %v634, %v634
        %v699 = vmul.f32 %v639, %v639
        %v700 = vmul.f32 %v642, %v642
        %v701 = vmul.f32 %v647, %v647
        %v702 = vmul.f32 %v650, %v650
        %v703 = vmul.f32 %v655, %v655
        %v704 = vmul.f32 %v658, %v658
        %v705 = vmul.f32 %v663, %v663
        %v706 = vmul.f32 %v666, %v666
        %v707 = vadd.f32 %v691, %v692
        %v708 = vadd.f32 %v707, %v693
        %v709 = vadd.f32 %v708, %v694
        %v710 = vadd.f32 %v709, %v695
        %v711 = vadd.f32 %v710, %v696
        %v712 = vadd.f32 %v711, %v697
        %v713 = vadd.f32 %v712, %v698
        %v714 = vadd.f32 %v713, %v699
        %v715 = vadd.f32 %v714, %v700
        %v716 = vadd.f32 %v715, %v701
        %v717 = vadd.f32 %v716, %v702
        %v718 = vadd.f32 %v717, %v703
        %v719 = vadd.f32 %v718, %v704
        %v720 = vadd.f32 %v719, %v705
        %v721 = vadd.f32 %v720, %v706
        %v722 = vrot.slane %v721, 4
        %v723 = vadd.f32 %v721, %v722
        %v724 = vrot.slane %v723, 2
        %v725 = vadd.f32 %v723, %v724
        %v726 = vrot.slane %v725, 1
        %v727 = vadd.f32 %v725, %v726
        %v728 = vmul.f32 %v727, 0.0078125
        %v729 = vmul.f32 %v690, %v690
        %v730 = vsub.f32 %v728, %v729
        %v731 = vmax.f32 %v730, 0.0
        %v732 = vld [vmem:[%s346] sm:$0x3]
        %v733 = vadd.f32 %v731, 1e-05
        %v734 = vrsqrt.pop %v733
        %v735 = vmul.f32 %v732, %v734
        %v736 = vmul.f32 %v690, %v735
        %v738 = vrot.slane %v736, 7
        %v740 = vsub.f32 %v732, %v738
        %v741 = vlaneseq
        %v742 = vshrl.u32 %v741, 7
        %v743 = vsub.s32 0, %v742
        %v744 = vrot.slane %v735, %v743
        %v745 = vmul.f32 %v607, %v744
        %v746 = vmul.f32 %v610, %v744
        %v747 = vmul.f32 %v615, %v744
        %v748 = vmul.f32 %v618, %v744
        %v749 = vmul.f32 %v623, %v744
        %v750 = vmul.f32 %v626, %v744
        %v751 = vmul.f32 %v631, %v744
        %v752 = vmul.f32 %v634, %v744
        %v753 = vmul.f32 %v639, %v744
        %v754 = vmul.f32 %v642, %v744
        %v755 = vmul.f32 %v647, %v744
        %v756 = vmul.f32 %v650, %v744
        %v757 = vmul.f32 %v655, %v744
        %v758 = vmul.f32 %v658, %v744
        %v759 = vmul.f32 %v663, %v744
        %v760 = vmul.f32 %v666, %v744
        %v761 = vlaneseq
        %v762 = vshrl.u32 %v761, 7
        %v763 = vsub.s32 1, %v762
        %v764 = vrot.slane %v740, %v763
        %v765 = vadd.f32 %v745, %v764
        %v766 = vadd.f32 %v746, %v764
        %v767 = vadd.f32 %v747, %v764
        %v768 = vadd.f32 %v748, %v764
        %v769 = vadd.f32 %v749, %v764
        %v770 = vadd.f32 %v750, %v764
        %v771 = vadd.f32 %v751, %v764
        %v772 = vadd.f32 %v752, %v764
        %v773 = vadd.f32 %v753, %v764
        %v774 = vadd.f32 %v754, %v764
        %v775 = vadd.f32 %v755, %v764
        %v776 = vadd.f32 %v756, %v764
        %v777 = vadd.f32 %v757, %v764
        %v778 = vadd.f32 %v758, %v764
        %v779 = vadd.f32 %v759, %v764
        %v780 = vadd.f32 %v760, %v764
        %v781 = vld [vmem:[%s302] sm:$0xff]
        %v782 = vld [vmem:[%s302 + $0x8] sm:$0xff]
        %v783 = vld [vmem:[%s302 + $0x10] sm:$0xff]
        %v784 = vld [vmem:[%s302 + $0x18] sm:$0xff]
        %v785 = vld [vmem:[%s302 + $0x20] sm:$0xff]
        %v786 = vld [vmem:[%s302 + $0x28] sm:$0xff]
        %v787 = vld [vmem:[%s302 + $0x30] sm:$0xff]
        %v788 = vld [vmem:[%s302 + $0x38] sm:$0xff]
        %v789 = vld [vmem:[%s302 + $0x40] sm:$0xff]
        %v790 = vld [vmem:[%s302 + $0x48] sm:$0xff]
        %v791 = vld [vmem:[%s302 + $0x50] sm:$0xff]
        %v792 = vld [vmem:[%s302 + $0x58] sm:$0xff]
        %v793 = vld [vmem:[%s302 + $0x60] sm:$0xff]
        %v794 = vld [vmem:[%s302 + $0x68] sm:$0xff]
        %v795 = vld [vmem:[%s302 + $0x70] sm:$0xff]
        %v796 = vld [vmem:[%s302 + $0x78] sm:$0xff]
        %v797 = vmax.f32 %v765, 0.0
        %v798 = vmax.f32 %v766, 0.0
        %v799 = vmax.f32 %v767, 0.0
        %v800 = vmax.f32 %v768, 0.0
        %v801 = vmax.f32 %v769, 0.0
        %v802 = vmax.f32 %v770, 0.0
        %v803 = vmax.f32 %v771, 0.0
        %v804 = vmax.f32 %v772, 0.0
        %v805 = vmax.f32 %v773, 0.0
        %v806 = vmax.f32 %v774, 0.0
        %v807 = vmax.f32 %v775, 0.0
        %v808 = vmax.f32 %v776, 0.0
        %v809 = vmax.f32 %v777, 0.0
        %v810 = vmax.f32 %v778, 0.0
        %v811 = vmax.f32 %v779, 0.0
        %v812 = vmax.f32 %v780, 0.0
        %v813 = vadd.f32 %v781, %v797
        %v814 = vadd.f32 %v782, %v798
        %v815 = vadd.f32 %v783, %v799
        %v816 = vadd.f32 %v784, %v800
        %v817 = vadd.f32 %v785, %v801
        %v818 = vadd.f32 %v786, %v802
        %v819 = vadd.f32 %v787, %v803
        %v820 = vadd.f32 %v788, %v804
        %v821 = vadd.f32 %v789, %v805
        %v822 = vadd.f32 %v790, %v806
        %v823 = vadd.f32 %v791, %v807
        %v824 = vadd.f32 %v792, %v808
        %v825 = vadd.f32 %v793, %v809
        %v826 = vadd.f32 %v794, %v810
        %v827 = vadd.f32 %v795, %v811
        %v828 = vadd.f32 %v796, %v812
        %829 = vst [vmem:[%s342] sm:$0xff] %v813
        %830 = vst [vmem:[%s342 + $0x8] sm:$0xff] %v814
        %831 = vst [vmem:[%s342 + $0x10] sm:$0xff] %v815
        %832 = vst [vmem:[%s342 + $0x18] sm:$0xff] %v816
        %833 = vst [vmem:[%s342 + $0x20] sm:$0xff] %v817
        %834 = vst [vmem:[%s342 + $0x28] sm:$0xff] %v818
        %835 = vst [vmem:[%s342 + $0x30] sm:$0xff] %v819
        %836 = vst [vmem:[%s342 + $0x38] sm:$0xff] %v820
        %837 = vst [vmem:[%s342 + $0x40] sm:$0xff] %v821
        %838 = vst [vmem:[%s342 + $0x48] sm:$0xff] %v822
        %839 = vst [vmem:[%s342 + $0x50] sm:$0xff] %v823
        %840 = vst [vmem:[%s342 + $0x58] sm:$0xff] %v824
        %841 = vst [vmem:[%s342 + $0x60] sm:$0xff] %v825
        %842 = vst [vmem:[%s342 + $0x68] sm:$0xff] %v826
        %843 = vst [vmem:[%s342 + $0x70] sm:$0xff] %v827
        %844 = vst [vmem:[%s342 + $0x78] sm:$0xff] %v828
        %s845 = sand.u32 %s128, 1
        %s846 = scalar_lea.sflag [#allocation5], %s845
        %s847 = sand.u32 %s128, 1
        %s848 = smul.addr %s847, 128
        %s849 = scalar_lea.vmem [#allocation6], %s848
        // Predicated region
        $region79: #{resblock_forward.1} parent=69 // pred_check
          %p850 = pneg %p138
        $region80: #{resblock_forward.1} parent=69 // pred_check_branch
          %852 = sbr.rel (%p850) target = $region82
        $region81: #{resblock_forward.1} parent=69 // pred_region
          %s854 = ssub.s32 2048, 2048
          %855 = vsyncadd %s846, %s854
          %s856 = smul.addr %s21, 128
          %s857 = scalar_lea.hbm %s4, %s856
          %s858 = sshll.u32 %s849, 4
          %s859 = int_to_ptr.vmem [resolvable:$true] %s858
          %864 = dma.vmem_to_hbm [thread:$0]  %s859, 2048, %s857, %s846, 128, 256, 8
        $region82: #{resblock_forward.1} parent=69 // pred_fallthru
          _
      $region70: #{resblock_forward.1} parent=5 // pred_fallthru
        _
      %p865 = scmp.le.s32.totalorder 2, %s16
      // Predicated region
      $region83: #{resblock_forward.1} parent=5 // pred_check
        %p866 = pneg %p865
      $region84: #{resblock_forward.1} parent=5 // pred_check_branch
        %868 = sbr.rel (%p866) target = $region86
      $region85: #{resblock_forward.1} parent=5 // pred_region
        %s869 = ssub.s32 %s16, 2
        // Predicated region
        $region87: #{resblock_forward.1} parent=85 // pred_check
          %p870 = pneg %p144
        $region88: #{resblock_forward.1} parent=85 // pred_check_branch
          %872 = sbr.rel (%p870) target = $region90
        $region89: #{resblock_forward.1} parent=85 // pred_region
          %s873 = sand.u32 %s129, 1
          %s874 = scalar_lea.sflag [#allocation5], %s873
          %s875 = sand.u32 %s129, 1
          %s876 = smul.addr %s875, 128
          %s877 = scalar_lea.vmem [#allocation6], %s876
          %878 = dma.done %s874, 2048
        $region90: #{resblock_forward.1} parent=85 // pred_fallthru
          _
      $region86: #{resblock_forward.1} parent=5 // pred_fallthru
        _
    $region6: #{resblock_forward.1} parent=1 // loop_footer
      %s20 = sadd.s32 1, %s16
    $region7: #{resblock_forward.1} parent=1 // loop_footer_branch
      %15 = sbr.rel target = $region3
    $region8: #{resblock_forward.1} parent=1 // loop_exit
      _
    %879 = vsyncpa [#allocation4], 1
    %s880 = scalar_lea.sflag [#allocation4], 1
    %881 = vsyncpa %s880, 1
    %882 = vsyncpa [#allocation5], 1
    %s883 = scalar_lea.sflag [#allocation5], 1
    %884 = vsyncpa %s883, 1

</llo_original>
